<compile_context>
chip_gen: v7x
topology: tpu7x:2x2x1
jax: 0.10.0
libtpu: 0.0.40
codegen_flags: <defaults>
</compile_context>

<pallas_src>
import functools

import jax
import jax.numpy as jnp
from jax.experimental import pallas as pl
from jax.experimental.pallas import tpu as pltpu


def _round_up(x, m):
    return ((x + m - 1) // m) * m


def _sigmoid(x):
    # Single EUP op (tanh); the mul/add ride otherwise-idle VALU slots.
    return 0.5 * jnp.tanh(0.5 * x) + 0.5


def _act_dtype_for_device():
    # bf16 VPU/EUP exists on v6e/v7x; keep elementwise math in f32 elsewhere.
    try:
        kind = jax.devices()[0].device_kind.lower()
    except Exception:
        return jnp.float32
    if "v6" in kind or "v7" in kind:
        return jnp.bfloat16
    return jnp.float32


def mlp_kernel(x_ref,
               w1_ref, b1_ref,
               w2_ref, b2_ref,
               w3_ref, b3_ref,
               w4_ref, b4_ref,
               o_ref, *, act_dtype):
    # In-kernel cast of the (bb, D) input tile to bf16 (MXU-native LHS).
    h = x_ref[...].astype(jnp.bfloat16)
    # fc1..fc3: MXU matmul with f32 accumulation, f32 bias add, sigmoid in
    # act_dtype (bf16 on v6e/v7x, f32 on v5e), bf16 into the next dot.
    for w_ref, b_ref in ((w1_ref, b1_ref), (w2_ref, b2_ref), (w3_ref, b3_ref)):
        acc = jnp.dot(h, w_ref[...], preferred_element_type=jnp.float32)
        a = _sigmoid((acc + b_ref[...]).astype(act_dtype))
        h = a.astype(jnp.bfloat16)
    # Final linear layer (lane-padded to 128): f32 accumulate + bias, f32 store.
    out = jnp.dot(h, w4_ref[...], preferred_element_type=jnp.float32) + b4_ref[...]
    o_ref[...] = out.astype(o_ref.dtype)


def prepare_params(params):
    """One-time kernel-ready param prep (call once, NOT per forward).

    Casts weights to bf16 and pads the final layer to a multiple of 128 output
    lanes so the kernel's store is lane-dense.  Biases stay f32, shape (1, F).
    """
    (w1, b1), (w2, b2), (w3, b3), (w4, b4) = params
    n_actions = w4.shape[1]
    n_pad = _round_up(max(n_actions, 128), 128)
    w4p = jnp.pad(w4, ((0, 0), (0, n_pad - n_actions)))
    b4p = jnp.pad(b4, ((0, 0), (0, n_pad - n_actions)))
    return ((w1.astype(jnp.bfloat16), b1.astype(jnp.float32)),
            (w2.astype(jnp.bfloat16), b2.astype(jnp.float32)),
            (w3.astype(jnp.bfloat16), b3.astype(jnp.float32)),
            (w4p.astype(jnp.bfloat16), b4p.astype(jnp.float32)))


@functools.partial(jax.jit, static_argnames=("n_actions", "block_b"))
def simplest_mlp_forward(x, prepped_params, *, n_actions, block_b=1024):
    """x: (B, 1, D) float32; prepped_params from prepare_params().

    Returns (B, n_actions) float32.
    """
    x2d = jnp.squeeze(x, axis=1)                       # module glue: squeeze(1)
    B, D = x2d.shape
    (w1, b1), (w2, b2), (w3, b3), (w4p, b4p) = prepped_params
    n_out_pad = w4p.shape[1]

    # Batch tiling: one big tile when possible; pad B to a tile multiple.
    bb = min(block_b, _round_up(B, 8))
    B_pad = _round_up(B, bb)
    # If everything landed in a single tile but there is enough work, split in
    # two so the parallel batch axis spans both TensorCores on v7x.
    if B_pad // bb == 1 and B_pad >= 16 and (B_pad // 2) % 8 == 0:
        bb = B_pad // 2
    if B_pad != B:
        x2d = jnp.pad(x2d, ((0, B_pad - B), (0, 0)))
    grid = (B_pad // bb,)

    act_dtype = _act_dtype_for_device()

    def full_spec(shape):
        nd = len(shape)
        return pl.BlockSpec(shape, lambda i: (0,) * nd)

    in_specs = [
        pl.BlockSpec((bb, D), lambda i: (i, 0)),         # x tiled over batch
        full_spec(w1.shape), full_spec(b1.shape),        # weights/biases stay
        full_spec(w2.shape), full_spec(b2.shape),        # resident in VMEM
        full_spec(w3.shape), full_spec(b3.shape),        # (grid-invariant maps)
        full_spec(w4p.shape), full_spec(b4p.shape),
    ]
    out_spec = pl.BlockSpec((bb, n_out_pad), lambda i: (i, 0))

    out = pl.pallas_call(
        functools.partial(mlp_kernel, act_dtype=act_dtype),
        out_shape=jax.ShapeDtypeStruct((B_pad, n_out_pad), jnp.float32),
        grid_spec=pltpu.PrefetchScalarGridSpec(
            num_scalar_prefetch=0,
            grid=grid,
            in_specs=in_specs,
            out_specs=out_spec,
        ),
        compiler_params=pltpu.CompilerParams(
            dimension_semantics=("parallel",)),          # batch tiles -> TCs
    )(x2d, w1, b1, w2, b2, w3, b3, w4p, b4p)

    return out[:B, :n_actions]


# ----------------------------- init + reference -----------------------------

def xavier_normal(key, fan_in, fan_out, dtype=jnp.float32):
    # torch.nn.init.xavier_normal_ (gain=1): std = sqrt(2/(fan_in+fan_out)).
    std = (2.0 / (fan_in + fan_out)) ** 0.5
    return std * jax.random.normal(key, (fan_in, fan_out), dtype=dtype)


def default_linear_init(key, fan_in, fan_out, dtype=jnp.float32):
    # torch nn.Linear default init: U(-1/sqrt(fan_in), 1/sqrt(fan_in)).
    bound = 1.0 / (fan_in ** 0.5)
    kw, kb = jax.random.split(key)
    w = jax.random.uniform(kw, (fan_in, fan_out), dtype, -bound, bound)
    b = jax.random.uniform(kb, (fan_out,), dtype, -bound, bound)
    return w, b


def init_params(key, input_dim, n_actions):
    keys = jax.random.split(key, 7)
    # fc1..fc3: xavier_normal_ weights, default-init biases (as in the module).
    w1 = xavier_normal(keys[0], input_dim, 256)
    b1 = jax.random.uniform(keys[1], (256,), jnp.float32,
                            -1.0 / input_dim ** 0.5, 1.0 / input_dim ** 0.5)
    w2 = xavier_normal(keys[2], 256, 256)
    b2 = jax.random.uniform(keys[3], (256,), jnp.float32,
                            -1.0 / 256 ** 0.5, 1.0 / 256 ** 0.5)
    w3 = xavier_normal(keys[4], 256, 128)
    b3 = jax.random.uniform(keys[5], (128,), jnp.float32,
                            -1.0 / 256 ** 0.5, 1.0 / 256 ** 0.5)
    # self.out: plain nn.Linear default init.
    w4, b4 = default_linear_init(keys[6], 128, n_actions)
    # Biases as (1, F) for clean 2-D broadcasting inside the kernel.
    return ((w1, b1[None, :]), (w2, b2[None, :]),
            (w3, b3[None, :]), (w4, b4[None, :]))


def reference_forward(x, params):
    # Full-f32 reference matching the PyTorch module semantics.
    x2d = jnp.squeeze(x, axis=1)
    (w1, b1), (w2, b2), (w3, b3), (w4, b4) = params
    h = jax.nn.sigmoid(x2d @ w1 + b1)
    h = jax.nn.sigmoid(h @ w2 + b2)
    h = jax.nn.sigmoid(h @ w3 + b3)
    return h @ w4 + b4


if __name__ == "__main__":
    key = jax.random.PRNGKey(0)
    k_param, k_x = jax.random.split(key)

    batch, input_dim, n_actions = 8, 32, 8
    params = init_params(k_param, input_dim, n_actions)
    prepped = prepare_params(params)          # one-time weight prep (hoisted)
    x = jax.random.normal(k_x, (batch, 1, input_dim), dtype=jnp.float32)

    out = simplest_mlp_forward(x, prepped, n_actions=n_actions)
    out = jax.block_until_ready(out)

    ref = reference_forward(x, params)
    assert out.shape == (batch, n_actions), out.shape
    # bf16 matmul operands (and bf16 activations on v6e/v7x) deviate slightly
    # from the full-f32 PyTorch module; tolerance reflects that.
    max_err = float(jnp.max(jnp.abs(out - ref)))
    assert jnp.allclose(out, ref, atol=3e-2, rtol=3e-2), (
        f"mismatch vs reference (max abs err {max_err:.3e})")

    print("KERNEL_OK")
</pallas_src>

<mosaic_0001>
module attributes {stable_mosaic.version = 11 : i64} {
  func.func @mlp_kernel(%arg0: i32, %arg1: memref<8x32xf32, #tpu.memory_space<vmem>>, %arg2: memref<32x256xbf16, #tpu.memory_space<vmem>>, %arg3: memref<1x256xf32, #tpu.memory_space<vmem>>, %arg4: memref<256x256xbf16, #tpu.memory_space<vmem>>, %arg5: memref<1x256xf32, #tpu.memory_space<vmem>>, %arg6: memref<256x128xbf16, #tpu.memory_space<vmem>>, %arg7: memref<1x128xf32, #tpu.memory_space<vmem>>, %arg8: memref<128x128xbf16, #tpu.memory_space<vmem>>, %arg9: memref<1x128xf32, #tpu.memory_space<vmem>>, %arg10: memref<8x128xf32, #tpu.memory_space<vmem>>) attributes {dimension_semantics = [#tpu.dimension_semantics<parallel>], iteration_bounds = array<i64: 1>, scalar_prefetch = 0 : i64, scratch_operands = 0 : i64, tpu.core_type = #tpu.core_type<tc>, window_params = [{transform_indices = @transform_0, window_bounds = array<i64: 8, 32>}, {pipeline_mode = #tpu.pipeline_mode<synchronous>, transform_indices = @transform_1, window_bounds = array<i64: 32, 256>}, {pipeline_mode = #tpu.pipeline_mode<synchronous>, transform_indices = @transform_2, window_bounds = array<i64: 1, 256>}, {pipeline_mode = #tpu.pipeline_mode<synchronous>, transform_indices = @transform_3, window_bounds = array<i64: 256, 256>}, {pipeline_mode = #tpu.pipeline_mode<synchronous>, transform_indices = @transform_4, window_bounds = array<i64: 1, 256>}, {pipeline_mode = #tpu.pipeline_mode<synchronous>, transform_indices = @transform_5, window_bounds = array<i64: 256, 128>}, {pipeline_mode = #tpu.pipeline_mode<synchronous>, transform_indices = @transform_6, window_bounds = array<i64: 1, 128>}, {pipeline_mode = #tpu.pipeline_mode<synchronous>, transform_indices = @transform_7, window_bounds = array<i64: 128, 128>}, {pipeline_mode = #tpu.pipeline_mode<synchronous>, transform_indices = @transform_8, window_bounds = array<i64: 1, 128>}, {transform_indices = @transform_9, window_bounds = array<i64: 8, 128>}]} {
    %c0 = arith.constant 0 : index
    %c0_0 = arith.constant 0 : index
    %0 = vector.load %arg1[%c0, %c0_0] : memref<8x32xf32, #tpu.memory_space<vmem>>, vector<8x32xf32>
    %1 = arith.truncf %0 : vector<8x32xf32> to vector<8x32xbf16>
    %c0_1 = arith.constant 0 : index
    %c0_2 = arith.constant 0 : index
    %2 = vector.load %arg2[%c0_1, %c0_2] : memref<32x256xbf16, #tpu.memory_space<vmem>>, vector<32x256xbf16>
    %cst = arith.constant dense<0.000000e+00> : vector<8x256xf32>
    %3 = tpu.matmul %1, %2, %cst {dimension_numbers = #tpu.dot_dimension_numbers<[1], [0], [0], [1], [0, 0, 1, 1], [], []>} : vector<8x32xbf16>, vector<32x256xbf16>, vector<8x256xf32> -> vector<8x256xf32>
    %c0_3 = arith.constant 0 : index
    %c0_4 = arith.constant 0 : index
    %4 = vector.load %arg3[%c0_3, %c0_4] : memref<1x256xf32, #tpu.memory_space<vmem>>, vector<1x256xf32>
    %5 = vector.broadcast %4 : vector<1x256xf32> to vector<8x256xf32>
    %6 = arith.addf %3, %5 : vector<8x256xf32>
    %cst_5 = arith.constant 5.000000e-01 : f32
    %7 = vector.broadcast %cst_5 : f32 to vector<8x256xf32>
    %8 = arith.mulf %7, %6 : vector<8x256xf32>
    %9 = math.tanh %8 : vector<8x256xf32>
    %cst_6 = arith.constant 5.000000e-01 : f32
    %10 = vector.broadcast %cst_6 : f32 to vector<8x256xf32>
    %11 = arith.mulf %10, %9 : vector<8x256xf32>
    %cst_7 = arith.constant 5.000000e-01 : f32
    %12 = vector.broadcast %cst_7 : f32 to vector<8x256xf32>
    %13 = arith.addf %11, %12 : vector<8x256xf32>
    %14 = arith.truncf %13 : vector<8x256xf32> to vector<8x256xbf16>
    %c0_8 = arith.constant 0 : index
    %c0_9 = arith.constant 0 : index
    %15 = vector.load %arg4[%c0_8, %c0_9] : memref<256x256xbf16, #tpu.memory_space<vmem>>, vector<256x256xbf16>
    %cst_10 = arith.constant dense<0.000000e+00> : vector<8x256xf32>
    %16 = tpu.matmul %14, %15, %cst_10 {dimension_numbers = #tpu.dot_dimension_numbers<[1], [0], [0], [1], [0, 0, 1, 1], [], []>} : vector<8x256xbf16>, vector<256x256xbf16>, vector<8x256xf32> -> vector<8x256xf32>
    %c0_11 = arith.constant 0 : index
    %c0_12 = arith.constant 0 : index
    %17 = vector.load %arg5[%c0_11, %c0_12] : memref<1x256xf32, #tpu.memory_space<vmem>>, vector<1x256xf32>
    %18 = vector.broadcast %17 : vector<1x256xf32> to vector<8x256xf32>
    %19 = arith.addf %16, %18 : vector<8x256xf32>
    %cst_13 = arith.constant 5.000000e-01 : f32
    %20 = vector.broadcast %cst_13 : f32 to vector<8x256xf32>
    %21 = arith.mulf %20, %19 : vector<8x256xf32>
    %22 = math.tanh %21 : vector<8x256xf32>
    %cst_14 = arith.constant 5.000000e-01 : f32
    %23 = vector.broadcast %cst_14 : f32 to vector<8x256xf32>
    %24 = arith.mulf %23, %22 : vector<8x256xf32>
    %cst_15 = arith.constant 5.000000e-01 : f32
    %25 = vector.broadcast %cst_15 : f32 to vector<8x256xf32>
    %26 = arith.addf %24, %25 : vector<8x256xf32>
    %27 = arith.truncf %26 : vector<8x256xf32> to vector<8x256xbf16>
    %c0_16 = arith.constant 0 : index
    %c0_17 = arith.constant 0 : index
    %28 = vector.load %arg6[%c0_16, %c0_17] : memref<256x128xbf16, #tpu.memory_space<vmem>>, vector<256x128xbf16>
    %cst_18 = arith.constant dense<0.000000e+00> : vector<8x128xf32>
    %29 = tpu.matmul %27, %28, %cst_18 {dimension_numbers = #tpu.dot_dimension_numbers<[1], [0], [0], [1], [0, 0, 1, 1], [], []>} : vector<8x256xbf16>, vector<256x128xbf16>, vector<8x128xf32> -> vector<8x128xf32>
    %c0_19 = arith.constant 0 : index
    %c0_20 = arith.constant 0 : index
    %30 = vector.load %arg7[%c0_19, %c0_20] : memref<1x128xf32, #tpu.memory_space<vmem>>, vector<1x128xf32>
    %31 = vector.broadcast %30 : vector<1x128xf32> to vector<8x128xf32>
    %32 = arith.addf %29, %31 : vector<8x128xf32>
    %cst_21 = arith.constant 5.000000e-01 : f32
    %33 = vector.broadcast %cst_21 : f32 to vector<8x128xf32>
    %34 = arith.mulf %33, %32 : vector<8x128xf32>
    %35 = math.tanh %34 : vector<8x128xf32>
    %cst_22 = arith.constant 5.000000e-01 : f32
    %36 = vector.broadcast %cst_22 : f32 to vector<8x128xf32>
    %37 = arith.mulf %36, %35 : vector<8x128xf32>
    %cst_23 = arith.constant 5.000000e-01 : f32
    %38 = vector.broadcast %cst_23 : f32 to vector<8x128xf32>
    %39 = arith.addf %37, %38 : vector<8x128xf32>
    %40 = arith.truncf %39 : vector<8x128xf32> to vector<8x128xbf16>
    %c0_24 = arith.constant 0 : index
    %c0_25 = arith.constant 0 : index
    %41 = vector.load %arg8[%c0_24, %c0_25] : memref<128x128xbf16, #tpu.memory_space<vmem>>, vector<128x128xbf16>
    %cst_26 = arith.constant dense<0.000000e+00> : vector<8x128xf32>
    %42 = tpu.matmul %40, %41, %cst_26 {dimension_numbers = #tpu.dot_dimension_numbers<[1], [0], [0], [1], [0, 0, 1, 1], [], []>} : vector<8x128xbf16>, vector<128x128xbf16>, vector<8x128xf32> -> vector<8x128xf32>
    %c0_27 = arith.constant 0 : index
    %c0_28 = arith.constant 0 : index
    %43 = vector.load %arg9[%c0_27, %c0_28] : memref<1x128xf32, #tpu.memory_space<vmem>>, vector<1x128xf32>
    %44 = vector.broadcast %43 : vector<1x128xf32> to vector<8x128xf32>
    %45 = arith.addf %42, %44 : vector<8x128xf32>
    %c0_29 = arith.constant 0 : index
    %c0_30 = arith.constant 0 : index
    %46 = vector.load %arg10[%c0_29, %c0_30] : memref<8x128xf32, #tpu.memory_space<vmem>>, vector<8x128xf32>
    tpu.vector_store %arg10[%c0_29, %c0_30], %45 {strides = array<i32>} : memref<8x128xf32, #tpu.memory_space<vmem>>, vector<8x128xf32>,
    return
  }
  func.func @transform_0(%arg0: i32) -> (i32, i32) {
    %c0_i32 = arith.constant 0 : i32
    %c0_i32_0 = arith.constant 0 : i32
    return %arg0, %c0_i32 : i32, i32
  }
  func.func @transform_1(%arg0: i32) -> (i32, i32) {
    %c0_i32 = arith.constant 0 : i32
    %c0_i32_0 = arith.constant 0 : i32
    %c0_i32_1 = arith.constant 0 : i32
    return %c0_i32, %c0_i32_0 : i32, i32
  }
  func.func @transform_2(%arg0: i32) -> (i32, i32) {
    %c0_i32 = arith.constant 0 : i32
    %c0_i32_0 = arith.constant 0 : i32
    %c0_i32_1 = arith.constant 0 : i32
    return %c0_i32, %c0_i32_0 : i32, i32
  }
  func.func @transform_3(%arg0: i32) -> (i32, i32) {
    %c0_i32 = arith.constant 0 : i32
    %c0_i32_0 = arith.constant 0 : i32
    %c0_i32_1 = arith.constant 0 : i32
    return %c0_i32, %c0_i32_0 : i32, i32
  }
  func.func @transform_4(%arg0: i32) -> (i32, i32) {
    %c0_i32 = arith.constant 0 : i32
    %c0_i32_0 = arith.constant 0 : i32
    %c0_i32_1 = arith.constant 0 : i32
    return %c0_i32, %c0_i32_0 : i32, i32
  }
  func.func @transform_5(%arg0: i32) -> (i32, i32) {
    %c0_i32 = arith.constant 0 : i32
    %c0_i32_0 = arith.constant 0 : i32
    %c0_i32_1 = arith.constant 0 : i32
    return %c0_i32, %c0_i32_0 : i32, i32
  }
  func.func @transform_6(%arg0: i32) -> (i32, i32) {
    %c0_i32 = arith.constant 0 : i32
    %c0_i32_0 = arith.constant 0 : i32
    %c0_i32_1 = arith.constant 0 : i32
    return %c0_i32, %c0_i32_0 : i32, i32
  }
  func.func @transform_7(%arg0: i32) -> (i32, i32) {
    %c0_i32 = arith.constant 0 : i32
    %c0_i32_0 = arith.constant 0 : i32
    %c0_i32_1 = arith.constant 0 : i32
    return %c0_i32, %c0_i32_0 : i32, i32
  }
  func.func @transform_8(%arg0: i32) -> (i32, i32) {
    %c0_i32 = arith.constant 0 : i32
    %c0_i32_0 = arith.constant 0 : i32
    %c0_i32_1 = arith.constant 0 : i32
    return %c0_i32, %c0_i32_0 : i32, i32
  }
  func.func @transform_9(%arg0: i32) -> (i32, i32) {
    %c0_i32 = arith.constant 0 : i32
    %c0_i32_0 = arith.constant 0 : i32
    return %arg0, %c0_i32 : i32, i32
  }
}

</mosaic_0001>

<llo_original>
// kernel: simplest_mlp_forward.1
$region0: #{simplest_mlp_forward.1}
  #allocation0 [shape = 'u32[]', space=smem, size = 0x4, offset = 0x4, fixed_abs, tag = 'smem constant byte address 0x4 - core index']
  #allocation1 [shape = 'u32[144,128]{1,0:T(1,128)}', space=vmem, size = 0x12000, scoped, tag = 'internal scratch']
  %s0 = inlined_call_operand.hbm [shape: f32[8,32], index: 0, kind: input, shape index: {}]
  %s1 = inlined_call_operand.hbm [shape: bf16[32,256], index: 1, kind: input, shape index: {}]
  %s2 = inlined_call_operand.vmem [shape: f32[1,256], index: 2, kind: input, shape index: {}]
  %s3 = inlined_call_operand.hbm [shape: bf16[256,256], index: 3, kind: input, shape index: {}]
  %s4 = inlined_call_operand.vmem [shape: f32[1,256], index: 4, kind: input, shape index: {}]
  %s5 = inlined_call_operand.hbm [shape: bf16[256,128], index: 5, kind: input, shape index: {}]
  %s6 = inlined_call_operand.vmem [shape: f32[1,128], index: 6, kind: input, shape index: {}]
  %s7 = inlined_call_operand.hbm [shape: bf16[128,128], index: 7, kind: input, shape index: {}]
  %s8 = inlined_call_operand.vmem [shape: f32[1,128], index: 8, kind: input, shape index: {}]
  %s9 = inlined_call_operand.hbm [shape: f32[8,128], index: 9, kind: output, shape index: {}]
  %s10 = sld [smem:[#allocation0]]
  $region66: #{simplest_mlp_forward.1} parent=0
    _
  %s12 = ssub.s32 1, %s10
  %s13 = scalar_select 0, %s12, %s10
  $region1: #{simplest_mlp_forward.1} parent=0
    #allocation2 [shape = 'u8[4096]{0}', space=vmem, size = 0x1000, scoped, tag = 'input window, operand 0, single buffered']
    #allocation3 [shape = 's32[1]{0}', space=sflag, size = 0x4, scoped, tag = 'scoped memory for simplest_mlp_forward.1']
    #allocation4 [shape = 's32[1]{0}', space=sflag, size = 0x4, scoped, tag = 'scoped memory for simplest_mlp_forward.1']
    #allocation5 [shape = 'u8[16384]{0}', space=vmem, size = 0x4000, scoped, tag = 'input window, operand 1, single buffered']
    #allocation6 [shape = 's32[1]{0}', space=sflag, size = 0x4, scoped, tag = 'scoped memory for simplest_mlp_forward.1']
    #allocation7 [shape = 'u8[131072]{0}', space=vmem, size = 0x20000, scoped, tag = 'input window, operand 3, single buffered']
    #allocation8 [shape = 'u8[65536]{0}', space=vmem, size = 0x10000, scoped, tag = 'input window, operand 5, single buffered']
    #allocation9 [shape = 's32[1]{0}', space=sflag, size = 0x4, scoped, tag = 'scoped memory for simplest_mlp_forward.1']
    #allocation10 [shape = 'u8[32768]{0}', space=vmem, size = 0x8000, scoped, tag = 'input window, operand 7, single buffered']
    #allocation11 [shape = 'u8[4096]{0}', space=vmem, size = 0x1000, scoped, tag = 'output window, operand 0, single buffered']
    %14 = vsyncpa [#allocation3], 0
    %15 = vsyncpa [#allocation6], 0
    %16 = vsyncpa [#allocation9], 0
    %17 = vsyncpa [#allocation4], 0
    // Predicated region
    $region2: #{simplest_mlp_forward.1} parent=1 // pred_check
      _
    $region3: #{simplest_mlp_forward.1} parent=1 // pred_check_branch
      %19 = sbr.rel (0) target = $region5
    $region4: #{simplest_mlp_forward.1} parent=1 // pred_region
      %s21 = ssub.s32 128, 128
      %22 = vsyncadd [#allocation3], %s21
      %s24 = sshll.u32 [#allocation2], 4
      %s25 = int_to_ptr.vmem [resolvable:$true] %s24
      %27 = dma.hbm_to_vmem [thread:$0]  %s0, 128, %s25, [#allocation3]
    $region5: #{simplest_mlp_forward.1} parent=1 // pred_fallthru
      _
    // Predicated region
    $region6: #{simplest_mlp_forward.1} parent=1 // pred_check
      _
    $region7: #{simplest_mlp_forward.1} parent=1 // pred_check_branch
      %29 = sbr.rel (0) target = $region9
    $region8: #{simplest_mlp_forward.1} parent=1 // pred_region
      %s31 = ssub.s32 512, 512
      %32 = vsyncadd [#allocation6], %s31
      %s33 = sshll.u32 [#allocation5], 4
      %s34 = int_to_ptr.vmem [resolvable:$true] %s33
      %39 = dma.hbm_to_vmem [thread:$0]  %s1, 512, %s34, [#allocation6], 128, 128, 8
    $region9: #{simplest_mlp_forward.1} parent=1 // pred_fallthru
      _
    // Predicated region
    $region10: #{simplest_mlp_forward.1} parent=1 // pred_check
      _
    $region11: #{simplest_mlp_forward.1} parent=1 // pred_check_branch
      %41 = sbr.rel (0) target = $region13
    $region12: #{simplest_mlp_forward.1} parent=1 // pred_region
      _
    $region13: #{simplest_mlp_forward.1} parent=1 // pred_fallthru
      _
    // Predicated region
    $region14: #{simplest_mlp_forward.1} parent=1 // pred_check
      _
    $region15: #{simplest_mlp_forward.1} parent=1 // pred_check_branch
      %43 = sbr.rel (0) target = $region17
    $region16: #{simplest_mlp_forward.1} parent=1 // pred_region
      %s45 = ssub.s32 4096, 4096
      %46 = vsyncadd [#allocation6], %s45
      %s47 = sshll.u32 [#allocation7], 4
      %s48 = int_to_ptr.vmem [resolvable:$true] %s47
      %53 = dma.hbm_to_vmem [thread:$0]  %s3, 4096, %s48, [#allocation6], 128, 128, 8
    $region17: #{simplest_mlp_forward.1} parent=1 // pred_fallthru
      _
    // Predicated region
    $region18: #{simplest_mlp_forward.1} parent=1 // pred_check
      _
    $region19: #{simplest_mlp_forward.1} parent=1 // pred_check_branch
      %55 = sbr.rel (0) target = $region21
    $region20: #{simplest_mlp_forward.1} parent=1 // pred_region
      _
    $region21: #{simplest_mlp_forward.1} parent=1 // pred_fallthru
      _
    // Predicated region
    $region22: #{simplest_mlp_forward.1} parent=1 // pred_check
      _
    $region23: #{simplest_mlp_forward.1} parent=1 // pred_check_branch
      %57 = sbr.rel (0) target = $region25
    $region24: #{simplest_mlp_forward.1} parent=1 // pred_region
      %s59 = ssub.s32 2048, 2048
      %60 = vsyncadd [#allocation9], %s59
      %s61 = sshll.u32 [#allocation8], 4
      %s62 = int_to_ptr.vmem [resolvable:$true] %s61
      %67 = dma.hbm_to_vmem [thread:$0]  %s5, 2048, %s62, [#allocation9], 64, 64, 4
    $region25: #{simplest_mlp_forward.1} parent=1 // pred_fallthru
      _
    // Predicated region
    $region26: #{simplest_mlp_forward.1} parent=1 // pred_check
      _
    $region27: #{simplest_mlp_forward.1} parent=1 // pred_check_branch
      %69 = sbr.rel (0) target = $region29
    $region28: #{simplest_mlp_forward.1} parent=1 // pred_region
      _
    $region29: #{simplest_mlp_forward.1} parent=1 // pred_fallthru
      _
    // Predicated region
    $region30: #{simplest_mlp_forward.1} parent=1 // pred_check
      _
    $region31: #{simplest_mlp_forward.1} parent=1 // pred_check_branch
      %71 = sbr.rel (0) target = $region33
    $region32: #{simplest_mlp_forward.1} parent=1 // pred_region
      %s73 = ssub.s32 1024, 1024
      %74 = vsyncadd [#allocation9], %s73
      %s75 = sshll.u32 [#allocation10], 4
      %s76 = int_to_ptr.vmem [resolvable:$true] %s75
      %81 = dma.hbm_to_vmem [thread:$0]  %s7, 1024, %s76, [#allocation9], 64, 64, 4
    $region33: #{simplest_mlp_forward.1} parent=1 // pred_fallthru
      _
    // Predicated region
    $region34: #{simplest_mlp_forward.1} parent=1 // pred_check
      _
    $region35: #{simplest_mlp_forward.1} parent=1 // pred_check_branch
      %83 = sbr.rel (0) target = $region37
    $region36: #{simplest_mlp_forward.1} parent=1 // pred_region
      _
    $region37: #{simplest_mlp_forward.1} parent=1 // pred_fallthru
      _
    // Predicated region
    $region38: #{simplest_mlp_forward.1} parent=1 // pred_check
      _
    $region39: #{simplest_mlp_forward.1} parent=1 // pred_check_branch
      %85 = sbr.rel (0) target = $region41
    $region40: #{simplest_mlp_forward.1} parent=1 // pred_region
      %86 = dma.done [#allocation3], 128
    $region41: #{simplest_mlp_forward.1} parent=1 // pred_fallthru
      _
    // Predicated region
    $region42: #{simplest_mlp_forward.1} parent=1 // pred_check
      _
    $region43: #{simplest_mlp_forward.1} parent=1 // pred_check_branch
      %88 = sbr.rel (0) target = $region45
    $region44: #{simplest_mlp_forward.1} parent=1 // pred_region
      %89 = dma.done [#allocation6], 512
    $region45: #{simplest_mlp_forward.1} parent=1 // pred_fallthru
      _
    // Predicated region
    $region46: #{simplest_mlp_forward.1} parent=1 // pred_check
      _
    $region47: #{simplest_mlp_forward.1} parent=1 // pred_check_branch
      %91 = sbr.rel (0) target = $region49
    $region48: #{simplest_mlp_forward.1} parent=1 // pred_region
      %92 = dma.done [#allocation6], 4096
    $region49: #{simplest_mlp_forward.1} parent=1 // pred_fallthru
      _
    // Predicated region
    $region50: #{simplest_mlp_forward.1} parent=1 // pred_check
      _
    $region51: #{simplest_mlp_forward.1} parent=1 // pred_check_branch
      %94 = sbr.rel (0) target = $region53
    $region52: #{simplest_mlp_forward.1} parent=1 // pred_region
      %95 = dma.done [#allocation9], 2048
    $region53: #{simplest_mlp_forward.1} parent=1 // pred_fallthru
      _
    // Predicated region
    $region54: #{simplest_mlp_forward.1} parent=1 // pred_check
      _
    $region55: #{simplest_mlp_forward.1} parent=1 // pred_check_branch
      %97 = sbr.rel (0) target = $region57
    $region56: #{simplest_mlp_forward.1} parent=1 // pred_region
      %98 = dma.done [#allocation9], 1024
    $region57: #{simplest_mlp_forward.1} parent=1 // pred_fallthru
      _
    %v100 = vld [vmem:[#allocation2] sm:$0xff]
    %v101 = vpack.c.bf16 %v100, %v100
    %v102 = vld [vmem:[#allocation5] sm:$0xff]
    %v103 = vld [vmem:[#allocation5 + $0x8] sm:$0xff]
    %v104 = vld [vmem:[#allocation5 + $0x10] sm:$0xff]
    %v105 = vld [vmem:[#allocation5 + $0x18] sm:$0xff]
    %v106 = vld [vmem:[%s2] sm:$0x3]
    %v108 = vlaneseq
    %v109 = vshrl.u32 %v108, 7
    %v110 = vsub.s32 0, %v109
    %v111 = vrot.slane %v106, %v110
    %v112 = vlaneseq
    %v113 = vshrl.u32 %v112, 7
    %v114 = vsub.s32 1, %v113
    %v115 = vrot.slane %v106, %v114
    %v122 = vunpack.c.l.b16 %v102
    %v123 = vunpack.c.h.b16 %v102
    %v124 = vunpack.c.l.b16 %v103
    %v125 = vunpack.c.h.b16 %v103
    %v126 = vunpack.c.l.b16 %v104
    %v127 = vunpack.c.h.b16 %v104
    %v128 = vunpack.c.l.b16 %v105
    %v129 = vunpack.c.h.b16 %v105
    %v130 = vpack.c.b16 %v124, %v122
    %v131 = vpack.c.b16 %v125, %v123
    %v132 = vpack.c.b16 %v128, %v126
    %v133 = vpack.c.b16 %v129, %v127
    %vm138 = vcmask 261120
    %v140 = vsel %vm138, %v101, 0
    %142 = vmatprep.subr.bf16.mxu0 %v131
    %143 = vmatpush1.bf16.msra.mxu0 %v130
    %144 = vmatprep.subr.bf16.mxu0 %v133
    %145 = vmatpush1.bf16.msra.mxu0 %v132
    %146 = vmatprep.subr.bf16.mxu0 0
    %147 = vmatpush1.bf16.msra.mxu0 0
    %148 = vmatprep.subr.bf16.mxu0 0
    %149 = vmatpush1.bf16.msra.mxu0 0
    %150 = vmatprep.subr.bf16.mxu0 0
    %151 = vmatpush1.bf16.msra.mxu0 0
    %152 = vmatprep.subr.bf16.mxu0 0
    %153 = vmatpush1.bf16.msra.mxu0 0
    %154 = vmatprep.subr.bf16.mxu0 0
    %155 = vmatpush1.bf16.msra.mxu0 0
    %156 = vmatprep.subr.bf16.mxu0 0
    %157 = vmatpush1.bf16.msra.mxu0 0
    %158 = vmatprep.subr.bf16.mxu0 0
    %159 = vmatpush1.bf16.msra.mxu0 0
    %160 = vmatprep.subr.bf16.mxu0 0
    %161 = vmatpush1.bf16.msra.mxu0 0
    %162 = vmatprep.subr.bf16.mxu0 0
    %163 = vmatpush1.bf16.msra.mxu0 0
    %164 = vmatprep.subr.bf16.mxu0 0
    %165 = vmatpush1.bf16.msra.mxu0 0
    %166 = vmatprep.subr.bf16.mxu0 0
    %167 = vmatpush1.bf16.msra.mxu0 0
    %168 = vmatprep.subr.bf16.mxu0 0
    %169 = vmatpush1.bf16.msra.mxu0 0
    %170 = vmatprep.subr.bf16.mxu0 0
    %171 = vmatpush1.bf16.msra.mxu0 0
    %172 = vmatprep.subr.bf16.mxu0 0
    %173 = vmatpush1.bf16.msra.mxu0 0
    %174 = vmatprep.mubr.bf16.mxu0 0
    %175 = vmatmul.mubr.bf16.gmra.mrb[0].mxu0 %v140
    %v176 = vpop.f32.mrb[0].mxu0
    %v177 = vadd.f32 %v111, %v176
    %v178 = vpop.f32.mrb[0].mxu0
    %v179 = vadd.f32 %v115, %v178
    %v180 = vpop.f32.mrb[0].mxu0
    %v181 = vpop.f32.mrb[0].mxu0
    %182 = vdwg.mxu0
    %v183 = vmul.f32 %v177, 0.5
    %v184 = vmul.f32 %v179, 0.5
    %v185 = vtanh.pop %v183
    %v186 = vtanh.pop %v184
    %v187 = vmul.f32 %v185, 0.5
    %v188 = vmul.f32 %v186, 0.5
    %v189 = vadd.f32 %v187, 0.5
    %v190 = vadd.f32 %v188, 0.5
    %v191 = vpack.c.bf16 %v189, %v189
    %v192 = vpack.c.bf16 %v190, %v190
    %v193 = vld [vmem:[#allocation7] sm:$0xff]
    %v194 = vld [vmem:[#allocation7 + $0x8] sm:$0xff]
    %v195 = vld [vmem:[#allocation7 + $0x10] sm:$0xff]
    %v196 = vld [vmem:[#allocation7 + $0x18] sm:$0xff]
    %v197 = vld [vmem:[#allocation7 + $0x20] sm:$0xff]
    %v198 = vld [vmem:[#allocation7 + $0x28] sm:$0xff]
    %v199 = vld [vmem:[#allocation7 + $0x30] sm:$0xff]
    %v200 = vld [vmem:[#allocation7 + $0x38] sm:$0xff]
    %v201 = vld [vmem:[#allocation7 + $0x40] sm:$0xff]
    %v202 = vld [vmem:[#allocation7 + $0x48] sm:$0xff]
    %v203 = vld [vmem:[#allocation7 + $0x50] sm:$0xff]
    %v204 = vld [vmem:[#allocation7 + $0x58] sm:$0xff]
    %v205 = vld [vmem:[#allocation7 + $0x60] sm:$0xff]
    %v206 = vld [vmem:[#allocation7 + $0x68] sm:$0xff]
    %v207 = vld [vmem:[#allocation7 + $0x70] sm:$0xff]
    %v208 = vld [vmem:[#allocation7 + $0x78] sm:$0xff]
    %v209 = vld [vmem:[#allocation7 + $0x80] sm:$0xff]
    %v210 = vld [vmem:[#allocation7 + $0x88] sm:$0xff]
    %v211 = vld [vmem:[#allocation7 + $0x90] sm:$0xff]
    %v212 = vld [vmem:[#allocation7 + $0x98] sm:$0xff]
    %v213 = vld [vmem:[#allocation7 + $0xa0] sm:$0xff]
    %v214 = vld [vmem:[#allocation7 + $0xa8] sm:$0xff]
    %v215 = vld [vmem:[#allocation7 + $0xb0] sm:$0xff]
    %v216 = vld [vmem:[#allocation7 + $0xb8] sm:$0xff]
    %v217 = vld [vmem:[#allocation7 + $0xc0] sm:$0xff]
    %v218 = vld [vmem:[#allocation7 + $0xc8] sm:$0xff]
    %v219 = vld [vmem:[#allocation7 + $0xd0] sm:$0xff]
    %v220 = vld [vmem:[#allocation7 + $0xd8] sm:$0xff]
    %v221 = vld [vmem:[#allocation7 + $0xe0] sm:$0xff]
    %v222 = vld [vmem:[#allocation7 + $0xe8] sm:$0xff]
    %v223 = vld [vmem:[#allocation7 + $0xf0] sm:$0xff]
    %v224 = vld [vmem:[#allocation7 + $0xf8] sm:$0xff]
    %v225 = vld [vmem:[%s4] sm:$0x3]
    %v227 = vlaneseq
    %v228 = vshrl.u32 %v227, 7
    %v229 = vsub.s32 0, %v228
    %v230 = vrot.slane %v225, %v229
    %v231 = vlaneseq
    %v232 = vshrl.u32 %v231, 7
    %v233 = vsub.s32 1, %v232
    %v234 = vrot.slane %v225, %v233
    %v269 = vunpack.c.l.b16 %v193
    %v270 = vunpack.c.h.b16 %v193
    %v271 = vunpack.c.l.b16 %v194
    %v272 = vunpack.c.h.b16 %v194
    %v273 = vunpack.c.l.b16 %v195
    %v274 = vunpack.c.h.b16 %v195
    %v275 = vunpack.c.l.b16 %v196
    %v276 = vunpack.c.h.b16 %v196
    %v277 = vunpack.c.l.b16 %v197
    %v278 = vunpack.c.h.b16 %v197
    %v279 = vunpack.c.l.b16 %v198
    %v280 = vunpack.c.h.b16 %v198
    %v281 = vunpack.c.l.b16 %v199
    %v282 = vunpack.c.h.b16 %v199
    %v283 = vunpack.c.l.b16 %v200
    %v284 = vunpack.c.h.b16 %v200
    %v285 = vunpack.c.l.b16 %v201
    %v286 = vunpack.c.h.b16 %v201
    %v287 = vunpack.c.l.b16 %v202
    %v288 = vunpack.c.h.b16 %v202
    %v289 = vunpack.c.l.b16 %v203
    %v290 = vunpack.c.h.b16 %v203
    %v291 = vunpack.c.l.b16 %v204
    %v292 = vunpack.c.h.b16 %v204
    %v293 = vunpack.c.l.b16 %v205
    %v294 = vunpack.c.h.b16 %v205
    %v295 = vunpack.c.l.b16 %v206
    %v296 = vunpack.c.h.b16 %v206
    %v297 = vunpack.c.l.b16 %v207
    %v298 = vunpack.c.h.b16 %v207
    %v299 = vunpack.c.l.b16 %v208
    %v300 = vunpack.c.h.b16 %v208
    %v301 = vunpack.c.l.b16 %v209
    %v302 = vunpack.c.h.b16 %v209
    %v303 = vunpack.c.l.b16 %v210
    %v304 = vunpack.c.h.b16 %v210
    %v305 = vunpack.c.l.b16 %v211
    %v306 = vunpack.c.h.b16 %v211
    %v307 = vunpack.c.l.b16 %v212
    %v308 = vunpack.c.h.b16 %v212
    %v309 = vunpack.c.l.b16 %v213
    %v310 = vunpack.c.h.b16 %v213
    %v311 = vunpack.c.l.b16 %v214
    %v312 = vunpack.c.h.b16 %v214
    %v313 = vunpack.c.l.b16 %v215
    %v314 = vunpack.c.h.b16 %v215
    %v315 = vunpack.c.l.b16 %v216
    %v316 = vunpack.c.h.b16 %v216
    %v317 = vunpack.c.l.b16 %v217
    %v318 = vunpack.c.h.b16 %v217
    %v319 = vunpack.c.l.b16 %v218
    %v320 = vunpack.c.h.b16 %v218
    %v321 = vunpack.c.l.b16 %v219
    %v322 = vunpack.c.h.b16 %v219
    %v323 = vunpack.c.l.b16 %v220
    %v324 = vunpack.c.h.b16 %v220
    %v325 = vunpack.c.l.b16 %v221
    %v326 = vunpack.c.h.b16 %v221
    %v327 = vunpack.c.l.b16 %v222
    %v328 = vunpack.c.h.b16 %v222
    %v329 = vunpack.c.l.b16 %v223
    %v330 = vunpack.c.h.b16 %v223
    %v331 = vunpack.c.l.b16 %v224
    %v332 = vunpack.c.h.b16 %v224
    %v333 = vpack.c.b16 %v271, %v269
    %v334 = vpack.c.b16 %v272, %v270
    %v335 = vpack.c.b16 %v275, %v273
    %v336 = vpack.c.b16 %v276, %v274
    %v337 = vpack.c.b16 %v279, %v277
    %v338 = vpack.c.b16 %v280, %v278
    %v339 = vpack.c.b16 %v283, %v281
    %v340 = vpack.c.b16 %v284, %v282
    %v341 = vpack.c.b16 %v287, %v285
    %v342 = vpack.c.b16 %v288, %v286
    %v343 = vpack.c.b16 %v291, %v289
    %v344 = vpack.c.b16 %v292, %v290
    %v345 = vpack.c.b16 %v295, %v293
    %v346 = vpack.c.b16 %v296, %v294
    %v347 = vpack.c.b16 %v299, %v297
    %v348 = vpack.c.b16 %v300, %v298
    %v349 = vpack.c.b16 %v303, %v301
    %v350 = vpack.c.b16 %v304, %v302
    %v351 = vpack.c.b16 %v307, %v305
    %v352 = vpack.c.b16 %v308, %v306
    %v353 = vpack.c.b16 %v311, %v309
    %v354 = vpack.c.b16 %v312, %v310
    %v355 = vpack.c.b16 %v315, %v313
    %v356 = vpack.c.b16 %v316, %v314
    %v357 = vpack.c.b16 %v319, %v317
    %v358 = vpack.c.b16 %v320, %v318
    %v359 = vpack.c.b16 %v323, %v321
    %v360 = vpack.c.b16 %v324, %v322
    %v361 = vpack.c.b16 %v327, %v325
    %v362 = vpack.c.b16 %v328, %v326
    %v363 = vpack.c.b16 %v331, %v329
    %v364 = vpack.c.b16 %v332, %v330
    %397 = vmatprep.subr.bf16.mxu0 %v334
    %398 = vmatpush1.bf16.msra.mxu0 %v333
    %399 = vmatprep.subr.bf16.mxu0 %v336
    %400 = vmatpush1.bf16.msra.mxu0 %v335
    %401 = vmatprep.subr.bf16.mxu0 %v338
    %402 = vmatpush1.bf16.msra.mxu0 %v337
    %403 = vmatprep.subr.bf16.mxu0 %v340
    %404 = vmatpush1.bf16.msra.mxu0 %v339
    %405 = vmatprep.subr.bf16.mxu0 %v342
    %406 = vmatpush1.bf16.msra.mxu0 %v341
    %407 = vmatprep.subr.bf16.mxu0 %v344
    %408 = vmatpush1.bf16.msra.mxu0 %v343
    %409 = vmatprep.subr.bf16.mxu0 %v346
    %410 = vmatpush1.bf16.msra.mxu0 %v345
    %411 = vmatprep.subr.bf16.mxu0 %v348
    %412 = vmatpush1.bf16.msra.mxu0 %v347
    %413 = vmatprep.subr.bf16.mxu0 %v350
    %414 = vmatpush1.bf16.msra.mxu0 %v349
    %415 = vmatprep.subr.bf16.mxu0 %v352
    %416 = vmatpush1.bf16.msra.mxu0 %v351
    %417 = vmatprep.subr.bf16.mxu0 %v354
    %418 = vmatpush1.bf16.msra.mxu0 %v353
    %419 = vmatprep.subr.bf16.mxu0 %v356
    %420 = vmatpush1.bf16.msra.mxu0 %v355
    %421 = vmatprep.subr.bf16.mxu0 %v358
    %422 = vmatpush1.bf16.msra.mxu0 %v357
    %423 = vmatprep.subr.bf16.mxu0 %v360
    %424 = vmatpush1.bf16.msra.mxu0 %v359
    %425 = vmatprep.subr.bf16.mxu0 %v362
    %426 = vmatpush1.bf16.msra.mxu0 %v361
    %427 = vmatprep.subr.bf16.mxu0 %v364
    %428 = vmatpush1.bf16.msra.mxu0 %v363
    %429 = vmatprep.mubr.bf16.mxu0 %v192
    %430 = vmatmul.mubr.bf16.gmra.mrb[0].mxu0 %v191
    %v431 = vpop.f32.mrb[0].mxu0
    %v432 = vadd.f32 %v230, %v431
    %v433 = vpop.f32.mrb[0].mxu0
    %v434 = vadd.f32 %v234, %v433
    %v435 = vpop.f32.mrb[0].mxu0
    %v436 = vpop.f32.mrb[0].mxu0
    %437 = vdwg.mxu0
    %v438 = vmul.f32 %v432, 0.5
    %v439 = vmul.f32 %v434, 0.5
    %v440 = vtanh.pop %v438
    %v441 = vtanh.pop %v439
    %v442 = vmul.f32 %v440, 0.5
    %v443 = vmul.f32 %v441, 0.5
    %v444 = vadd.f32 %v442, 0.5
    %v445 = vadd.f32 %v443, 0.5
    %v446 = vpack.c.bf16 %v444, %v444
    %v447 = vpack.c.bf16 %v445, %v445
    %v448 = vld [vmem:[#allocation8] sm:$0xf]
    %v449 = vld [vmem:[#allocation8 + $0x4] sm:$0xf]
    %v450 = vld [vmem:[#allocation8 + $0x8] sm:$0xf]
    %v451 = vld [vmem:[#allocation8 + $0xc] sm:$0xf]
    %v452 = vld [vmem:[#allocation8 + $0x10] sm:$0xf]
    %v453 = vld [vmem:[#allocation8 + $0x14] sm:$0xf]
    %v454 = vld [vmem:[#allocation8 + $0x18] sm:$0xf]
    %v455 = vld [vmem:[#allocation8 + $0x1c] sm:$0xf]
    %v456 = vld [vmem:[#allocation8 + $0x20] sm:$0xf]
    %v457 = vld [vmem:[#allocation8 + $0x24] sm:$0xf]
    %v458 = vld [vmem:[#allocation8 + $0x28] sm:$0xf]
    %v459 = vld [vmem:[#allocation8 + $0x2c] sm:$0xf]
    %v460 = vld [vmem:[#allocation8 + $0x30] sm:$0xf]
    %v461 = vld [vmem:[#allocation8 + $0x34] sm:$0xf]
    %v462 = vld [vmem:[#allocation8 + $0x38] sm:$0xf]
    %v463 = vld [vmem:[#allocation8 + $0x3c] sm:$0xf]
    %v464 = vld [vmem:[#allocation8 + $0x40] sm:$0xf]
    %v465 = vld [vmem:[#allocation8 + $0x44] sm:$0xf]
    %v466 = vld [vmem:[#allocation8 + $0x48] sm:$0xf]
    %v467 = vld [vmem:[#allocation8 + $0x4c] sm:$0xf]
    %v468 = vld [vmem:[#allocation8 + $0x50] sm:$0xf]
    %v469 = vld [vmem:[#allocation8 + $0x54] sm:$0xf]
    %v470 = vld [vmem:[#allocation8 + $0x58] sm:$0xf]
    %v471 = vld [vmem:[#allocation8 + $0x5c] sm:$0xf]
    %v472 = vld [vmem:[#allocation8 + $0x60] sm:$0xf]
    %v473 = vld [vmem:[#allocation8 + $0x64] sm:$0xf]
    %v474 = vld [vmem:[#allocation8 + $0x68] sm:$0xf]
    %v475 = vld [vmem:[#allocation8 + $0x6c] sm:$0xf]
    %v476 = vld [vmem:[#allocation8 + $0x70] sm:$0xf]
    %v477 = vld [vmem:[#allocation8 + $0x74] sm:$0xf]
    %v478 = vld [vmem:[#allocation8 + $0x78] sm:$0xf]
    %v479 = vld [vmem:[#allocation8 + $0x7c] sm:$0xf]
    %v480 = vld [vmem:[%s6] sm:$0x1]
    %v482 = vlaneseq
    %v483 = vshrl.u32 %v482, 7
    %v484 = vsub.s32 0, %v483
    %v485 = vrot.slane %v480, %v484
    %v519 = vunpack.c.l.b16 %v448
    %v520 = vunpack.c.l.b16 %v449
    %v521 = vunpack.c.l.b16 %v450
    %v522 = vunpack.c.l.b16 %v451
    %v523 = vunpack.c.l.b16 %v452
    %v524 = vunpack.c.l.b16 %v453
    %v525 = vunpack.c.l.b16 %v454
    %v526 = vunpack.c.l.b16 %v455
    %v527 = vunpack.c.l.b16 %v456
    %v528 = vunpack.c.l.b16 %v457
    %v529 = vunpack.c.l.b16 %v458
    %v530 = vunpack.c.l.b16 %v459
    %v531 = vunpack.c.l.b16 %v460
    %v532 = vunpack.c.l.b16 %v461
    %v533 = vunpack.c.l.b16 %v462
    %v534 = vunpack.c.l.b16 %v463
    %v535 = vunpack.c.l.b16 %v464
    %v536 = vunpack.c.l.b16 %v465
    %v537 = vunpack.c.l.b16 %v466
    %v538 = vunpack.c.l.b16 %v467
    %v539 = vunpack.c.l.b16 %v468
    %v540 = vunpack.c.l.b16 %v469
    %v541 = vunpack.c.l.b16 %v470
    %v542 = vunpack.c.l.b16 %v471
    %v543 = vunpack.c.l.b16 %v472
    %v544 = vunpack.c.l.b16 %v473
    %v545 = vunpack.c.l.b16 %v474
    %v546 = vunpack.c.l.b16 %v475
    %v547 = vunpack.c.l.b16 %v476
    %v548 = vunpack.c.l.b16 %v477
    %v549 = vunpack.c.l.b16 %v478
    %v550 = vunpack.c.l.b16 %v479
    %v551 = vpack.c.b16 %v520, %v519
    %v552 = vpack.c.b16 %v522, %v521
    %v553 = vpack.c.b16 %v524, %v523
    %v554 = vpack.c.b16 %v526, %v525
    %v555 = vpack.c.b16 %v528, %v527
    %v556 = vpack.c.b16 %v530, %v529
    %v557 = vpack.c.b16 %v532, %v531
    %v558 = vpack.c.b16 %v534, %v533
    %v559 = vpack.c.b16 %v536, %v535
    %v560 = vpack.c.b16 %v538, %v537
    %v561 = vpack.c.b16 %v540, %v539
    %v562 = vpack.c.b16 %v542, %v541
    %v563 = vpack.c.b16 %v544, %v543
    %v564 = vpack.c.b16 %v546, %v545
    %v565 = vpack.c.b16 %v548, %v547
    %v566 = vpack.c.b16 %v550, %v549
    %583 = vmatprep.subr.bf16.mxu0 0
    %584 = vmatpush1.bf16.msra.mxu0 %v551
    %585 = vmatprep.subr.bf16.mxu0 0
    %586 = vmatpush1.bf16.msra.mxu0 %v552
    %587 = vmatprep.subr.bf16.mxu0 0
    %588 = vmatpush1.bf16.msra.mxu0 %v553
    %589 = vmatprep.subr.bf16.mxu0 0
    %590 = vmatpush1.bf16.msra.mxu0 %v554
    %591 = vmatprep.subr.bf16.mxu0 0
    %592 = vmatpush1.bf16.msra.mxu0 %v555
    %593 = vmatprep.subr.bf16.mxu0 0
    %594 = vmatpush1.bf16.msra.mxu0 %v556
    %595 = vmatprep.subr.bf16.mxu0 0
    %596 = vmatpush1.bf16.msra.mxu0 %v557
    %597 = vmatprep.subr.bf16.mxu0 0
    %598 = vmatpush1.bf16.msra.mxu0 %v558
    %599 = vmatprep.subr.bf16.mxu0 0
    %600 = vmatpush1.bf16.msra.mxu0 %v559
    %601 = vmatprep.subr.bf16.mxu0 0
    %602 = vmatpush1.bf16.msra.mxu0 %v560
    %603 = vmatprep.subr.bf16.mxu0 0
    %604 = vmatpush1.bf16.msra.mxu0 %v561
    %605 = vmatprep.subr.bf16.mxu0 0
    %606 = vmatpush1.bf16.msra.mxu0 %v562
    %607 = vmatprep.subr.bf16.mxu0 0
    %608 = vmatpush1.bf16.msra.mxu0 %v563
    %609 = vmatprep.subr.bf16.mxu0 0
    %610 = vmatpush1.bf16.msra.mxu0 %v564
    %611 = vmatprep.subr.bf16.mxu0 0
    %612 = vmatpush1.bf16.msra.mxu0 %v565
    %613 = vmatprep.subr.bf16.mxu0 0
    %614 = vmatpush1.bf16.msra.mxu0 %v566
    %615 = vmatprep.mubr.bf16.mxu0 %v447
    %616 = vmatmul.mubr.bf16.gmra.mrb[0].mxu0 %v446
    %v617 = vpop.f32.mrb[0].mxu0
    %v618 = vadd.f32 %v485, %v617
    %v619 = vpop.f32.mrb[0].mxu0
    %v620 = vpop.f32.mrb[0].mxu0
    %v621 = vpop.f32.mrb[0].mxu0
    %622 = vdwg.mxu0
    %v623 = vmul.f32 %v618, 0.5
    %v624 = vtanh.pop %v623
    %v625 = vmul.f32 %v624, 0.5
    %v626 = vadd.f32 %v625, 0.5
    %v627 = vpack.c.bf16 %v626, %v626
    %v628 = vld [vmem:[#allocation10] sm:$0xf]
    %v629 = vld [vmem:[#allocation10 + $0x4] sm:$0xf]
    %v630 = vld [vmem:[#allocation10 + $0x8] sm:$0xf]
    %v631 = vld [vmem:[#allocation10 + $0xc] sm:$0xf]
    %v632 = vld [vmem:[#allocation10 + $0x10] sm:$0xf]
    %v633 = vld [vmem:[#allocation10 + $0x14] sm:$0xf]
    %v634 = vld [vmem:[#allocation10 + $0x18] sm:$0xf]
    %v635 = vld [vmem:[#allocation10 + $0x1c] sm:$0xf]
    %v636 = vld [vmem:[#allocation10 + $0x20] sm:$0xf]
    %v637 = vld [vmem:[#allocation10 + $0x24] sm:$0xf]
    %v638 = vld [vmem:[#allocation10 + $0x28] sm:$0xf]
    %v639 = vld [vmem:[#allocation10 + $0x2c] sm:$0xf]
    %v640 = vld [vmem:[#allocation10 + $0x30] sm:$0xf]
    %v641 = vld [vmem:[#allocation10 + $0x34] sm:$0xf]
    %v642 = vld [vmem:[#allocation10 + $0x38] sm:$0xf]
    %v643 = vld [vmem:[#allocation10 + $0x3c] sm:$0xf]
    %v644 = vld [vmem:[%s8] sm:$0x1]
    %v646 = vlaneseq
    %v647 = vshrl.u32 %v646, 7
    %v648 = vsub.s32 0, %v647
    %v649 = vrot.slane %v644, %v648
    %v667 = vunpack.c.l.b16 %v628
    %v668 = vunpack.c.l.b16 %v629
    %v669 = vunpack.c.l.b16 %v630
    %v670 = vunpack.c.l.b16 %v631
    %v671 = vunpack.c.l.b16 %v632
    %v672 = vunpack.c.l.b16 %v633
    %v673 = vunpack.c.l.b16 %v634
    %v674 = vunpack.c.l.b16 %v635
    %v675 = vunpack.c.l.b16 %v636
    %v676 = vunpack.c.l.b16 %v637
    %v677 = vunpack.c.l.b16 %v638
    %v678 = vunpack.c.l.b16 %v639
    %v679 = vunpack.c.l.b16 %v640
    %v680 = vunpack.c.l.b16 %v641
    %v681 = vunpack.c.l.b16 %v642
    %v682 = vunpack.c.l.b16 %v643
    %v683 = vpack.c.b16 %v668, %v667
    %v684 = vpack.c.b16 %v670, %v669
    %v685 = vpack.c.b16 %v672, %v671
    %v686 = vpack.c.b16 %v674, %v673
    %v687 = vpack.c.b16 %v676, %v675
    %v688 = vpack.c.b16 %v678, %v677
    %v689 = vpack.c.b16 %v680, %v679
    %v690 = vpack.c.b16 %v682, %v681
    %699 = vmatprep.subr.bf16.mxu0 0
    %700 = vmatpush1.bf16.msra.mxu0 %v683
    %701 = vmatprep.subr.bf16.mxu0 0
    %702 = vmatpush1.bf16.msra.mxu0 %v684
    %703 = vmatprep.subr.bf16.mxu0 0
    %704 = vmatpush1.bf16.msra.mxu0 %v685
    %705 = vmatprep.subr.bf16.mxu0 0
    %706 = vmatpush1.bf16.msra.mxu0 %v686
    %707 = vmatprep.subr.bf16.mxu0 0
    %708 = vmatpush1.bf16.msra.mxu0 %v687
    %709 = vmatprep.subr.bf16.mxu0 0
    %710 = vmatpush1.bf16.msra.mxu0 %v688
    %711 = vmatprep.subr.bf16.mxu0 0
    %712 = vmatpush1.bf16.msra.mxu0 %v689
    %713 = vmatprep.subr.bf16.mxu0 0
    %714 = vmatpush1.bf16.msra.mxu0 %v690
    %715 = vmatprep.subr.bf16.mxu0 0
    %716 = vmatpush1.bf16.msra.mxu0 0
    %717 = vmatprep.subr.bf16.mxu0 0
    %718 = vmatpush1.bf16.msra.mxu0 0
    %719 = vmatprep.subr.bf16.mxu0 0
    %720 = vmatpush1.bf16.msra.mxu0 0
    %721 = vmatprep.subr.bf16.mxu0 0
    %722 = vmatpush1.bf16.msra.mxu0 0
    %723 = vmatprep.subr.bf16.mxu0 0
    %724 = vmatpush1.bf16.msra.mxu0 0
    %725 = vmatprep.subr.bf16.mxu0 0
    %726 = vmatpush1.bf16.msra.mxu0 0
    %727 = vmatprep.subr.bf16.mxu0 0
    %728 = vmatpush1.bf16.msra.mxu0 0
    %729 = vmatprep.subr.bf16.mxu0 0
    %730 = vmatpush1.bf16.msra.mxu0 0
    %731 = vmatprep.mubr.bf16.mxu0 0
    %732 = vmatmul.mubr.bf16.gmra.mrb[0].mxu0 %v627
    %v733 = vpop.f32.mrb[0].mxu0
    %v734 = vadd.f32 %v649, %v733
    %v735 = vpop.f32.mrb[0].mxu0
    %v736 = vpop.f32.mrb[0].mxu0
    %v737 = vpop.f32.mrb[0].mxu0
    %738 = vdwg.mxu0
    %739 = vst [vmem:[#allocation11] sm:$0xff] %v734
    // Predicated region
    $region58: #{simplest_mlp_forward.1} parent=1 // pred_check
      _
    $region59: #{simplest_mlp_forward.1} parent=1 // pred_check_branch
      %741 = sbr.rel (0) target = $region61
    $region60: #{simplest_mlp_forward.1} parent=1 // pred_region
      %s743 = ssub.s32 128, 128
      %744 = vsyncadd [#allocation4], %s743
      %s746 = sshll.u32 [#allocation11], 4
      %s747 = int_to_ptr.vmem [resolvable:$true] %s746
      %749 = dma.vmem_to_hbm [thread:$0]  %s747, 128, %s9, [#allocation4]
    $region61: #{simplest_mlp_forward.1} parent=1 // pred_fallthru
      _
    // Predicated region
    $region62: #{simplest_mlp_forward.1} parent=1 // pred_check
      _
    $region63: #{simplest_mlp_forward.1} parent=1 // pred_check_branch
      %751 = sbr.rel (0) target = $region65
    $region64: #{simplest_mlp_forward.1} parent=1 // pred_region
      %752 = dma.done [#allocation4], 128
    $region65: #{simplest_mlp_forward.1} parent=1 // pred_fallthru
      _
    %753 = vsyncpa [#allocation3], 1
    %754 = vsyncpa [#allocation6], 1
    %755 = vsyncpa [#allocation9], 1
    %756 = vsyncpa [#allocation4], 1

</llo_original>
